<compile_context>
chip_gen: v7x
topology: tpu7x:2x2x1
jax: 0.10.0
libtpu: 0.0.40
codegen_flags: <defaults>
</compile_context>

<pallas_src>
import jax
import jax.numpy as jnp
from jax.experimental import pallas as pl
from jax.experimental.pallas import tpu as pltpu


def _make_se_kernel(hw_total):
    inv_hw = 1.0 / float(hw_total)

    def se_kernel(x_ref, w1_ref, b1_ref, w2_ref, b2_ref, o_ref):
        # x_ref/o_ref: (NB, HWf, Cf) block; weight refs are grid-invariant.
        wdt = w1_ref.dtype

        # nn.AdaptiveAvgPool2d(1): f32 accumulation, no f32 copy of the block.
        pooled = jnp.sum(x_ref[...], axis=1, dtype=jnp.float32) * inv_hw      # (NB, Cf)

        # Conv2d(C, mid, 1, bias=False) + folded BN1 + ReLU.  With lane folding the
        # F-times-tiled weight also sums the spatial folds back to per-channel.
        h = jnp.dot(pooled.astype(wdt), w1_ref[...],
                    preferred_element_type=jnp.float32)                        # (NB, mid)
        h = jnp.maximum(h + b1_ref[...], 0.0)

        # Conv2d(mid, C, 1, bias=False) + folded BN2 + Sigmoid.
        g = jnp.dot(h.astype(wdt), w2_ref[...],
                    preferred_element_type=jnp.float32)                        # (NB, Cf)
        g = jax.nn.sigmoid(g + b2_ref[...])

        # x * gate: x is read straight from VMEM, gate cast once (for bf16 nets the
        # bf16 gate multiply matches PyTorch inference to ~1e-3, documented).
        o_ref[...] = x_ref[...] * g.astype(o_ref.dtype)[:, None, :]

    return se_kernel


def _vmem_capacity_bytes():
    try:
        return int(pltpu.get_tpu_info().vmem_capacity_bytes)
    except Exception:
        return 64 * 2**20          # conservative (v7x per-TC VMEM)


def _pick_fold(hw, c):
    """Largest F dividing HW with F*C <= 128 (lane-dense stores when C < 128)."""
    if c >= 128:
        return 1
    best = 1
    for f in range(2, 128 // c + 1):
        if hw % f == 0:
            best = f
    return best


def _pick_nb(n, per_sample_bytes, weight_bytes, budget_bytes):
    """Samples per block: fill the VMEM budget, keep grid length >= 2 for the v7x
    dual TensorCore, and prefer a divisor of N so there is no padded tail block."""
    slack = 2 * 2**20
    cap = max(1, (budget_bytes - 2 * weight_bytes - slack) // (4 * per_sample_bytes))
    if n >= 2:
        cap = min(cap, max(1, n // 2))
    cap = max(1, min(cap, n))
    for nb in range(cap, 0, -1):
        if n % nb == 0:
            return nb
    return 1


def se_module_nhwc(x, w1, w2, bn1, bn2, eps=1e-5):
    """Channels-last SE block, no wrapper transposes.
    x: (N, H, W, C).  w1: (mid, C, 1, 1).  w2: (C, mid, 1, 1).
    bn1/bn2 = (gamma, beta, running_mean, running_var), eval-mode BatchNorm."""
    N, H, W, C = x.shape
    mid = w1.shape[0]
    HW = H * W
    dt = x.dtype

    # Fold eval-mode BN scale/shift into the 1x1-conv weights (per output channel).
    g1, beta1, m1, v1 = bn1
    g2, beta2, m2, v2 = bn2
    s1 = g1 / jnp.sqrt(v1 + eps)
    b1 = beta1 - m1 * s1
    s2 = g2 / jnp.sqrt(v2 + eps)
    b2 = beta2 - m2 * s2
    w1f = w1.reshape(mid, C).T * s1[None, :]             # (C, mid)
    w2f = w2.reshape(C, mid).T * s2[None, :]             # (mid, C)

    # Lane folding for C < 128: pack F spatial positions into the lane axis via a
    # wrapper reshape; tiling the weights/bias keeps the kernel fold-agnostic.
    F = _pick_fold(HW, C)
    Cf, HWf = F * C, HW // F
    if F > 1:
        w1f = jnp.tile(w1f, (F, 1))                      # (Cf, mid)
        w2f = jnp.tile(w2f, (1, F))                      # (mid, Cf)
        b2 = jnp.tile(b2, F)                             # (Cf,)

    # Weights in the activation dtype (bf16 net -> native MXU path, half the weight
    # VMEM/DMA); biases and all accumulation stay in f32.
    w1f = w1f.astype(dt)
    w2f = w2f.astype(dt)
    b1v = b1.reshape(1, mid).astype(jnp.float32)
    b2v = b2.reshape(1, Cf).astype(jnp.float32)

    x_l = x.reshape(N, HWf, Cf)

    # Per-generation VMEM budget, block batching, and explicit VMEM limit.
    per_sample = HWf * Cf * dt.itemsize
    weight_bytes = (w1f.size + w2f.size) * dt.itemsize + (b1v.size + b2v.size) * 4
    vmem_cap = _vmem_capacity_bytes()
    budget = min(vmem_cap // 2, 48 * 2**20)
    NB = _pick_nb(N, per_sample, weight_bytes, budget)
    G = N // NB
    vmem_limit = int(min(vmem_cap,
                         max(16 * 2**20,
                             4 * NB * per_sample + 2 * weight_bytes + 2 * 2**20)))

    kernel = _make_se_kernel(HW)
    xo_spec = pl.BlockSpec((NB, HWf, Cf), lambda n: (n, 0, 0))
    w_shapes = [(Cf, mid), (1, mid), (mid, Cf), (1, Cf)]

    def call(single_buffer_weights):
        def const_spec(shape):
            if single_buffer_weights:
                # Grid-invariant operand: keep one resident copy instead of two.
                return pl.BlockSpec(shape, lambda n: (0, 0),
                                    pipeline_mode=pl.Buffered(1))
            return pl.BlockSpec(shape, lambda n: (0, 0))

        return pl.pallas_call(
            kernel,
            out_shape=jax.ShapeDtypeStruct((N, HWf, Cf), dt),
            grid=(G,),
            in_specs=[xo_spec] + [const_spec(s) for s in w_shapes],
            out_specs=xo_spec,
            compiler_params=pltpu.CompilerParams(
                dimension_semantics=("parallel",),
                vmem_limit_bytes=vmem_limit,
            ),
        )(x_l, w1f, b1v, w2f, b2v)

    try:
        out_l = call(True)
    except Exception:
        # Fallback for JAX versions without BlockSpec(pipeline_mode=...).
        out_l = call(False)

    return out_l.reshape(N, H, W, C)


def se_module(x, w1, w2, bn1, bn2, eps=1e-5):
    """NCHW entry point matching the PyTorch module (x: (N, C, H, W)).
    NOTE: the two transposes here roughly triple HBM traffic for this memory-bound
    op; channels-last models should call se_module_nhwc directly."""
    x_nhwc = jnp.transpose(x, (0, 2, 3, 1))
    out = se_module_nhwc(x_nhwc, w1, w2, bn1, bn2, eps=eps)
    return jnp.transpose(out, (0, 3, 1, 2))


if __name__ == "__main__":
    key = jax.random.PRNGKey(0)
    N, C, H, W = 2, 8, 16, 16
    reduction = 4
    mid = C // reduction
    eps = 1e-5

    k_x, k_w1, k_w2 = jax.random.split(key, 3)
    x = jax.random.normal(k_x, (N, C, H, W), dtype=jnp.float32)

    # Conv weights (kernel_size=1, bias=False), deterministic init.
    w1 = jax.random.normal(k_w1, (mid, C, 1, 1), dtype=jnp.float32) * 0.2
    w2 = jax.random.normal(k_w2, (C, mid, 1, 1), dtype=jnp.float32) * 0.2

    # Non-trivial eval-mode BatchNorm stats to exercise the folding path.
    bn1 = (1.0 + 0.10 * jnp.arange(mid, dtype=jnp.float32),   # gamma
           0.05 * jnp.arange(mid, dtype=jnp.float32),         # beta
           0.02 * jnp.arange(mid, dtype=jnp.float32),         # running_mean
           1.0 + 0.20 * jnp.arange(mid, dtype=jnp.float32))   # running_var
    bn2 = (1.0 + 0.05 * jnp.arange(C, dtype=jnp.float32),
           0.03 * jnp.arange(C, dtype=jnp.float32),
           0.01 * jnp.arange(C, dtype=jnp.float32),
           1.0 + 0.10 * jnp.arange(C, dtype=jnp.float32))

    out = se_module(x, w1, w2, bn1, bn2, eps=eps)
    jax.block_until_ready(out)

    # Plain-JAX reference (same eval-mode BN semantics as the PyTorch module).
    pooled = jnp.mean(x, axis=(2, 3))                                    # (N, C)
    h = pooled @ w1.reshape(mid, C).T
    h = (h - bn1[2]) / jnp.sqrt(bn1[3] + eps) * bn1[0] + bn1[1]
    h = jnp.maximum(h, 0.0)
    g = h @ w2.reshape(C, mid).T
    g = (g - bn2[2]) / jnp.sqrt(bn2[3] + eps) * bn2[0] + bn2[1]
    g = jax.nn.sigmoid(g)
    ref = x * g[:, :, None, None]

    assert jnp.allclose(out, ref, atol=1e-5, rtol=1e-5), "mismatch vs reference"
    print("KERNEL_OK")
</pallas_src>

<mosaic_0001>
module attributes {stable_mosaic.version = 11 : i64} {
  func.func @se_kernel(%arg0: i32, %arg1: memref<1x16x128xf32, #tpu.memory_space<vmem>>, %arg2: memref<128x2xf32, #tpu.memory_space<vmem>>, %arg3: memref<1x2xf32, #tpu.memory_space<vmem>>, %arg4: memref<2x128xf32, #tpu.memory_space<vmem>>, %arg5: memref<1x128xf32, #tpu.memory_space<vmem>>, %arg6: memref<1x16x128xf32, #tpu.memory_space<vmem>>) attributes {dimension_semantics = [#tpu.dimension_semantics<parallel>], iteration_bounds = array<i64: 2>, scalar_prefetch = 0 : i64, scratch_operands = 0 : i64, tpu.core_type = #tpu.core_type<tc>, window_params = [{transform_indices = @transform_0, window_bounds = array<i64: 1, 16, 128>}, {pipeline_mode = #tpu.pipeline_mode<synchronous>, transform_indices = @transform_1, window_bounds = array<i64: 128, 2>}, {pipeline_mode = #tpu.pipeline_mode<synchronous>, transform_indices = @transform_2, window_bounds = array<i64: 1, 2>}, {pipeline_mode = #tpu.pipeline_mode<synchronous>, transform_indices = @transform_3, window_bounds = array<i64: 2, 128>}, {pipeline_mode = #tpu.pipeline_mode<synchronous>, transform_indices = @transform_4, window_bounds = array<i64: 1, 128>}, {transform_indices = @transform_5, window_bounds = array<i64: 1, 16, 128>}]} {
    %c0 = arith.constant 0 : index
    %c0_0 = arith.constant 0 : index
    %c0_1 = arith.constant 0 : index
    %0 = vector.load %arg1[%c0, %c0_0, %c0_1] : memref<1x16x128xf32, #tpu.memory_space<vmem>>, vector<1x16x128xf32>
    %cst = arith.constant dense<0.000000e+00> : vector<1x128xf32>
    %1 = vector.multi_reduction <add>, %0, %cst [1] : vector<1x16x128xf32> to vector<1x128xf32>
    %cst_2 = arith.constant 3.906250e-03 : f32
    %2 = vector.broadcast %cst_2 : f32 to vector<1x128xf32>
    %3 = arith.mulf %1, %2 : vector<1x128xf32>
    %c0_3 = arith.constant 0 : index
    %c0_4 = arith.constant 0 : index
    %4 = vector.load %arg2[%c0_3, %c0_4] : memref<128x2xf32, #tpu.memory_space<vmem>>, vector<128x2xf32>
    %cst_5 = arith.constant dense<0.000000e+00> : vector<1x2xf32>
    %5 = tpu.matmul %3, %4, %cst_5 {dimension_numbers = #tpu.dot_dimension_numbers<[1], [0], [0], [1], [0, 0, 1, 1], [], []>} : vector<1x128xf32>, vector<128x2xf32>, vector<1x2xf32> -> vector<1x2xf32>
    %c0_6 = arith.constant 0 : index
    %c0_7 = arith.constant 0 : index
    %6 = vector.load %arg3[%c0_6, %c0_7] : memref<1x2xf32, #tpu.memory_space<vmem>>, vector<1x2xf32>
    %7 = arith.addf %5, %6 : vector<1x2xf32>
    %cst_8 = arith.constant 0.000000e+00 : f32
    %8 = vector.broadcast %cst_8 : f32 to vector<1x2xf32>
    %9 = arith.maximumf %7, %8 : vector<1x2xf32>
    %c0_9 = arith.constant 0 : index
    %c0_10 = arith.constant 0 : index
    %10 = vector.load %arg4[%c0_9, %c0_10] : memref<2x128xf32, #tpu.memory_space<vmem>>, vector<2x128xf32>
    %cst_11 = arith.constant dense<0.000000e+00> : vector<1x128xf32>
    %11 = tpu.matmul %9, %10, %cst_11 {dimension_numbers = #tpu.dot_dimension_numbers<[1], [0], [0], [1], [0, 0, 1, 1], [], []>} : vector<1x2xf32>, vector<2x128xf32>, vector<1x128xf32> -> vector<1x128xf32>
    %c0_12 = arith.constant 0 : index
    %c0_13 = arith.constant 0 : index
    %12 = vector.load %arg5[%c0_12, %c0_13] : memref<1x128xf32, #tpu.memory_space<vmem>>, vector<1x128xf32>
    %13 = arith.addf %11, %12 : vector<1x128xf32>
    %14 = arith.negf %13 : vector<1x128xf32>
    %15 = math.exp %14 : vector<1x128xf32>
    %cst_14 = arith.constant 1.000000e+00 : f32
    %16 = vector.broadcast %cst_14 : f32 to vector<1x128xf32>
    %17 = arith.addf %16, %15 : vector<1x128xf32>
    %18 = arith.divf %16, %17 : vector<1x128xf32>
    %c0_15 = arith.constant 0 : index
    %c0_16 = arith.constant 0 : index
    %c0_17 = arith.constant 0 : index
    %19 = vector.load %arg1[%c0_15, %c0_16, %c0_17] : memref<1x16x128xf32, #tpu.memory_space<vmem>>, vector<1x16x128xf32>
    %20 = vector.shape_cast %18 : vector<1x128xf32> to vector<1x1x128xf32>
    %21 = vector.broadcast %20 : vector<1x1x128xf32> to vector<1x16x128xf32>
    %22 = arith.mulf %19, %21 : vector<1x16x128xf32>
    %c0_18 = arith.constant 0 : index
    %c0_19 = arith.constant 0 : index
    %c0_20 = arith.constant 0 : index
    %23 = vector.load %arg6[%c0_18, %c0_19, %c0_20] : memref<1x16x128xf32, #tpu.memory_space<vmem>>, vector<1x16x128xf32>
    tpu.vector_store %arg6[%c0_18, %c0_19, %c0_20], %22 {strides = array<i32>} : memref<1x16x128xf32, #tpu.memory_space<vmem>>, vector<1x16x128xf32>,
    return
  }
  func.func @transform_0(%arg0: i32) -> (i32, i32, i32) {
    %c0_i32 = arith.constant 0 : i32
    %c0_i32_0 = arith.constant 0 : i32
    %c0_i32_1 = arith.constant 0 : i32
    return %arg0, %c0_i32, %c0_i32_0 : i32, i32, i32
  }
  func.func @transform_1(%arg0: i32) -> (i32, i32) {
    %c0_i32 = arith.constant 0 : i32
    %c0_i32_0 = arith.constant 0 : i32
    %c0_i32_1 = arith.constant 0 : i32
    return %c0_i32, %c0_i32_0 : i32, i32
  }
  func.func @transform_2(%arg0: i32) -> (i32, i32) {
    %c0_i32 = arith.constant 0 : i32
    %c0_i32_0 = arith.constant 0 : i32
    %c0_i32_1 = arith.constant 0 : i32
    return %c0_i32, %c0_i32_0 : i32, i32
  }
  func.func @transform_3(%arg0: i32) -> (i32, i32) {
    %c0_i32 = arith.constant 0 : i32
    %c0_i32_0 = arith.constant 0 : i32
    %c0_i32_1 = arith.constant 0 : i32
    return %c0_i32, %c0_i32_0 : i32, i32
  }
  func.func @transform_4(%arg0: i32) -> (i32, i32) {
    %c0_i32 = arith.constant 0 : i32
    %c0_i32_0 = arith.constant 0 : i32
    %c0_i32_1 = arith.constant 0 : i32
    return %c0_i32, %c0_i32_0 : i32, i32
  }
  func.func @transform_5(%arg0: i32) -> (i32, i32, i32) {
    %c0_i32 = arith.constant 0 : i32
    %c0_i32_0 = arith.constant 0 : i32
    %c0_i32_1 = arith.constant 0 : i32
    return %arg0, %c0_i32, %c0_i32_0 : i32, i32, i32
  }
}

module attributes {stable_mosaic.version = 11 : i64} {
  func.func @se_kernel(%arg0: i32, %arg1: memref<1x16x128xf32, #tpu.memory_space<vmem>>, %arg2: memref<128x2xf32, #tpu.memory_space<vmem>>, %arg3: memref<1x2xf32, #tpu.memory_space<vmem>>, %arg4: memref<2x128xf32, #tpu.memory_space<vmem>>, %arg5: memref<1x128xf32, #tpu.memory_space<vmem>>, %arg6: memref<1x16x128xf32, #tpu.memory_space<vmem>>) attributes {dimension_semantics = [#tpu.dimension_semantics<parallel>], iteration_bounds = array<i64: 2>, scalar_prefetch = 0 : i64, scratch_operands = 0 : i64, tpu.core_type = #tpu.core_type<tc>, window_params = [{transform_indices = @transform_0, window_bounds = array<i64: 1, 16, 128>}, {pipeline_mode = #tpu.pipeline_mode<synchronous>, transform_indices = @transform_1, window_bounds = array<i64: 128, 2>}, {pipeline_mode = #tpu.pipeline_mode<synchronous>, transform_indices = @transform_2, window_bounds = array<i64: 1, 2>}, {pipeline_mode = #tpu.pipeline_mode<synchronous>, transform_indices = @transform_3, window_bounds = array<i64: 2, 128>}, {pipeline_mode = #tpu.pipeline_mode<synchronous>, transform_indices = @transform_4, window_bounds = array<i64: 1, 128>}, {transform_indices = @transform_5, window_bounds = array<i64: 1, 16, 128>}]} {
    %c0 = arith.constant 0 : index
    %c0_0 = arith.constant 0 : index
    %c0_1 = arith.constant 0 : index
    %0 = vector.load %arg1[%c0, %c0_0, %c0_1] : memref<1x16x128xf32, #tpu.memory_space<vmem>>, vector<1x16x128xf32>
    %cst = arith.constant dense<0.000000e+00> : vector<1x128xf32>
    %1 = vector.multi_reduction <add>, %0, %cst [1] : vector<1x16x128xf32> to vector<1x128xf32>
    %cst_2 = arith.constant 3.906250e-03 : f32
    %2 = vector.broadcast %cst_2 : f32 to vector<1x128xf32>
    %3 = arith.mulf %1, %2 : vector<1x128xf32>
    %c0_3 = arith.constant 0 : index
    %c0_4 = arith.constant 0 : index
    %4 = vector.load %arg2[%c0_3, %c0_4] : memref<128x2xf32, #tpu.memory_space<vmem>>, vector<128x2xf32>
    %cst_5 = arith.constant dense<0.000000e+00> : vector<1x2xf32>
    %5 = tpu.matmul %3, %4, %cst_5 {dimension_numbers = #tpu.dot_dimension_numbers<[1], [0], [0], [1], [0, 0, 1, 1], [], []>} : vector<1x128xf32>, vector<128x2xf32>, vector<1x2xf32> -> vector<1x2xf32>
    %c0_6 = arith.constant 0 : index
    %c0_7 = arith.constant 0 : index
    %6 = vector.load %arg3[%c0_6, %c0_7] : memref<1x2xf32, #tpu.memory_space<vmem>>, vector<1x2xf32>
    %7 = arith.addf %5, %6 : vector<1x2xf32>
    %cst_8 = arith.constant 0.000000e+00 : f32
    %8 = vector.broadcast %cst_8 : f32 to vector<1x2xf32>
    %9 = arith.maximumf %7, %8 : vector<1x2xf32>
    %c0_9 = arith.constant 0 : index
    %c0_10 = arith.constant 0 : index
    %10 = vector.load %arg4[%c0_9, %c0_10] : memref<2x128xf32, #tpu.memory_space<vmem>>, vector<2x128xf32>
    %cst_11 = arith.constant dense<0.000000e+00> : vector<1x128xf32>
    %11 = tpu.matmul %9, %10, %cst_11 {dimension_numbers = #tpu.dot_dimension_numbers<[1], [0], [0], [1], [0, 0, 1, 1], [], []>} : vector<1x2xf32>, vector<2x128xf32>, vector<1x128xf32> -> vector<1x128xf32>
    %c0_12 = arith.constant 0 : index
    %c0_13 = arith.constant 0 : index
    %12 = vector.load %arg5[%c0_12, %c0_13] : memref<1x128xf32, #tpu.memory_space<vmem>>, vector<1x128xf32>
    %13 = arith.addf %11, %12 : vector<1x128xf32>
    %14 = arith.negf %13 : vector<1x128xf32>
    %15 = math.exp %14 : vector<1x128xf32>
    %cst_14 = arith.constant 1.000000e+00 : f32
    %16 = vector.broadcast %cst_14 : f32 to vector<1x128xf32>
    %17 = arith.addf %16, %15 : vector<1x128xf32>
    %18 = arith.divf %16, %17 : vector<1x128xf32>
    %c0_15 = arith.constant 0 : index
    %c0_16 = arith.constant 0 : index
    %c0_17 = arith.constant 0 : index
    %19 = vector.load %arg1[%c0_15, %c0_16, %c0_17] : memref<1x16x128xf32, #tpu.memory_space<vmem>>, vector<1x16x128xf32>
    %20 = vector.shape_cast %18 : vector<1x128xf32> to vector<1x1x128xf32>
    %21 = vector.broadcast %20 : vector<1x1x128xf32> to vector<1x16x128xf32>
    %22 = arith.mulf %19, %21 : vector<1x16x128xf32>
    %c0_18 = arith.constant 0 : index
    %c0_19 = arith.constant 0 : index
    %c0_20 = arith.constant 0 : index
    %23 = vector.load %arg6[%c0_18, %c0_19, %c0_20] : memref<1x16x128xf32, #tpu.memory_space<vmem>>, vector<1x16x128xf32>
    tpu.vector_store %arg6[%c0_18, %c0_19, %c0_20], %22 {strides = array<i32>} : memref<1x16x128xf32, #tpu.memory_space<vmem>>, vector<1x16x128xf32>,
    return
  }
  func.func @transform_0(%arg0: i32) -> (i32, i32, i32) {
    %c0_i32 = arith.constant 0 : i32
    %c0_i32_0 = arith.constant 0 : i32
    %c0_i32_1 = arith.constant 0 : i32
    return %arg0, %c0_i32, %c0_i32_0 : i32, i32, i32
  }
  func.func @transform_1(%arg0: i32) -> (i32, i32) {
    %c0_i32 = arith.constant 0 : i32
    %c0_i32_0 = arith.constant 0 : i32
    %c0_i32_1 = arith.constant 0 : i32
    return %c0_i32, %c0_i32_0 : i32, i32
  }
  func.func @transform_2(%arg0: i32) -> (i32, i32) {
    %c0_i32 = arith.constant 0 : i32
    %c0_i32_0 = arith.constant 0 : i32
    %c0_i32_1 = arith.constant 0 : i32
    return %c0_i32, %c0_i32_0 : i32, i32
  }
  func.func @transform_3(%arg0: i32) -> (i32, i32) {
    %c0_i32 = arith.constant 0 : i32
    %c0_i32_0 = arith.constant 0 : i32
    %c0_i32_1 = arith.constant 0 : i32
    return %c0_i32, %c0_i32_0 : i32, i32
  }
  func.func @transform_4(%arg0: i32) -> (i32, i32) {
    %c0_i32 = arith.constant 0 : i32
    %c0_i32_0 = arith.constant 0 : i32
    %c0_i32_1 = arith.constant 0 : i32
    return %c0_i32, %c0_i32_0 : i32, i32
  }
  func.func @transform_5(%arg0: i32) -> (i32, i32, i32) {
    %c0_i32 = arith.constant 0 : i32
    %c0_i32_0 = arith.constant 0 : i32
    %c0_i32_1 = arith.constant 0 : i32
    return %arg0, %c0_i32, %c0_i32_0 : i32, i32, i32
  }
}

</mosaic_0001>

<llo_original>
// kernel: tpu_custom_call.1
$region0: #{tpu_custom_call.1}
  #allocation0 [shape = 'u32[]', space=smem, size = 0x4, offset = 0x4, fixed_abs, tag = 'smem constant byte address 0x4 - core index']
  #allocation1 [shape = 'u32[144,128]{1,0:T(1,128)}', space=vmem, size = 0x12000, scoped, tag = 'internal scratch']
  %s0 = inlined_call_operand.vmem [shape: f32[2,16,128], index: 0, kind: input, shape index: {}]
  %s1 = inlined_call_operand.vmem [shape: f32[128,2], index: 1, kind: input, shape index: {}]
  %s2 = inlined_call_operand.vmem [shape: f32[1,2], index: 2, kind: input, shape index: {}]
  %s3 = inlined_call_operand.vmem [shape: f32[2,128], index: 3, kind: input, shape index: {}]
  %s4 = inlined_call_operand.vmem [shape: f32[1,128], index: 4, kind: input, shape index: {}]
  %s5 = inlined_call_operand.hbm [shape: f32[2,16,128], index: 5, kind: output, shape index: {}]
  %s6 = sld [smem:[#allocation0]]
  $region53: #{tpu_custom_call.1} parent=0
    _
  %s8 = ssub.s32 1, %s6
  %s9 = scalar_select 0, %s8, %s6
  $region1: #{tpu_custom_call.1} parent=0
    #allocation2 [shape = 'u8[16384]{0}', space=vmem, size = 0x4000, scoped, tag = 'output window, operand 0']
    #allocation3 [shape = 's32[2]{0}', space=sflag, size = 0x8, scoped, tag = 'scoped memory for tpu_custom_call.1']
    %10 = vsyncpa [#allocation3], 0
    %s11 = scalar_lea.sflag [#allocation3], 1
    %12 = vsyncpa %s11, 0
    loop: start=0, step=1, limit=4
    $region2: #{tpu_custom_call.1} parent=1 // loop_pre_header
      _
    $region3: #{tpu_custom_call.1} parent=1 // loop_header
      %s14 = sphi 0, %s18
      %p15 = scmp.ge.s32.totalorder %s14, 4
      %s24 = sphi 0, %s26
      %s27 = sphi 0, %s24
      %s28 = sphi 0, %s27
      %s44 = sphi 0, %s28
      %s48 = sphi 0, %s48
      %s50 = sphi 0, %s48
      %s51 = sphi 0, %s50
      %s65 = sphi 0, %s51
      %s69 = sphi 0, %s69
      %s71 = sphi 0, %s69
      %s72 = sphi 0, %s71
      %s86 = sphi 0, %s72
      %s90 = sphi 0, %s90
      %s92 = sphi 0, %s90
      %s93 = sphi 0, %s92
      %s107 = sphi 0, %s93
      %s111 = sphi 0, %s111
      %s113 = sphi 0, %s111
      %s114 = sphi 0, %s113
      %s128 = sphi 0, %s114
      %s134 = sphi 0, %s136
      %s137 = sphi 0, %s134
      %s138 = sphi 0, %s137
      %s154 = sphi 0, %s138
    $region4: #{tpu_custom_call.1} parent=1 // loop_header_branch
      %17 = sbr.rel (%p15) target = $region8
    $region5: #{tpu_custom_call.1} parent=1 // loop_body
      %s19 = ssub.s32 %s14, 1
      %s20 = ssub.s32 %s14, 2
      %s21 = sadd.s32 %s14, 1
      %s22 = ssub.s32 %s14, %s21
      %p23 = scmp.eq.s32.totalorder %s22, 0
      %s25 = sadd.s32 %s24, 1
      %s26 = scalar_select %p23, %s24, %s25
      %p29 = pneg %p23
      %p30 = scmp.eq.s32.totalorder %s14, 1
      %p31 = por %p29, %p30
      %p32 = scmp.ne.s32.totalorder %s24, %s27
      %p33 = scmp.eq.s32.totalorder %s14, 0
      %p34 = por %p32, %p33
      %p35 = scmp.ne.s32.totalorder %s24, %s27
      %p36 = scmp.eq.s32.totalorder %s19, 1
      %p37 = por %p35, %p36
      %p38 = scmp.ne.s32.totalorder %s27, %s28
      %p39 = scmp.eq.s32.totalorder %s19, 0
      %p40 = por %p38, %p39
      %p41 = scmp.ne.s32.totalorder %s27, %s28
      %p42 = scmp.eq.s32.totalorder %s20, 1
      %p43 = por %p41, %p42
      %p45 = scmp.ne.s32.totalorder %s28, %s44
      %p46 = scmp.eq.s32.totalorder %s20, 0
      %p47 = por %p45, %p46
      %s49 = sadd.s32 %s48, 1
      %p52 = scmp.eq.s32.totalorder %s14, 1
      %p53 = scmp.ne.s32.totalorder %s48, %s50
      %p54 = scmp.eq.s32.totalorder %s14, 0
      %p55 = por %p53, %p54
      %p56 = scmp.ne.s32.totalorder %s48, %s50
      %p57 = scmp.eq.s32.totalorder %s19, 1
      %p58 = por %p56, %p57
      %p59 = scmp.ne.s32.totalorder %s50, %s51
      %p60 = scmp.eq.s32.totalorder %s19, 0
      %p61 = por %p59, %p60
      %p62 = scmp.ne.s32.totalorder %s50, %s51
      %p63 = scmp.eq.s32.totalorder %s20, 1
      %p64 = por %p62, %p63
      %p66 = scmp.ne.s32.totalorder %s51, %s65
      %p67 = scmp.eq.s32.totalorder %s20, 0
      %p68 = por %p66, %p67
      %s70 = sadd.s32 %s69, 1
      %p73 = scmp.eq.s32.totalorder %s14, 1
      %p74 = scmp.ne.s32.totalorder %s69, %s71
      %p75 = scmp.eq.s32.totalorder %s14, 0
      %p76 = por %p74, %p75
      %p77 = scmp.ne.s32.totalorder %s69, %s71
      %p78 = scmp.eq.s32.totalorder %s19, 1
      %p79 = por %p77, %p78
      %p80 = scmp.ne.s32.totalorder %s71, %s72
      %p81 = scmp.eq.s32.totalorder %s19, 0
      %p82 = por %p80, %p81
      %p83 = scmp.ne.s32.totalorder %s71, %s72
      %p84 = scmp.eq.s32.totalorder %s20, 1
      %p85 = por %p83, %p84
      %p87 = scmp.ne.s32.totalorder %s72, %s86
      %p88 = scmp.eq.s32.totalorder %s20, 0
      %p89 = por %p87, %p88
      %s91 = sadd.s32 %s90, 1
      %p94 = scmp.eq.s32.totalorder %s14, 1
      %p95 = scmp.ne.s32.totalorder %s90, %s92
      %p96 = scmp.eq.s32.totalorder %s14, 0
      %p97 = por %p95, %p96
      %p98 = scmp.ne.s32.totalorder %s90, %s92
      %p99 = scmp.eq.s32.totalorder %s19, 1
      %p100 = por %p98, %p99
      %p101 = scmp.ne.s32.totalorder %s92, %s93
      %p102 = scmp.eq.s32.totalorder %s19, 0
      %p103 = por %p101, %p102
      %p104 = scmp.ne.s32.totalorder %s92, %s93
      %p105 = scmp.eq.s32.totalorder %s20, 1
      %p106 = por %p104, %p105
      %p108 = scmp.ne.s32.totalorder %s93, %s107
      %p109 = scmp.eq.s32.totalorder %s20, 0
      %p110 = por %p108, %p109
      %s112 = sadd.s32 %s111, 1
      %p115 = scmp.eq.s32.totalorder %s14, 1
      %p116 = scmp.ne.s32.totalorder %s111, %s113
      %p117 = scmp.eq.s32.totalorder %s14, 0
      %p118 = por %p116, %p117
      %p119 = scmp.ne.s32.totalorder %s111, %s113
      %p120 = scmp.eq.s32.totalorder %s19, 1
      %p121 = por %p119, %p120
      %p122 = scmp.ne.s32.totalorder %s113, %s114
      %p123 = scmp.eq.s32.totalorder %s19, 0
      %p124 = por %p122, %p123
      %p125 = scmp.ne.s32.totalorder %s113, %s114
      %p126 = scmp.eq.s32.totalorder %s20, 1
      %p127 = por %p125, %p126
      %p129 = scmp.ne.s32.totalorder %s114, %s128
      %p130 = scmp.eq.s32.totalorder %s20, 0
      %p131 = por %p129, %p130
      %s132 = ssub.s32 %s14, %s21
      %p133 = scmp.eq.s32.totalorder %s132, 0
      %s135 = sadd.s32 %s134, 1
      %s136 = scalar_select %p133, %s134, %s135
      %p139 = pneg %p133
      %p140 = scmp.eq.s32.totalorder %s14, 1
      %p141 = por %p139, %p140
      %p142 = scmp.ne.s32.totalorder %s134, %s137
      %p143 = scmp.eq.s32.totalorder %s14, 0
      %p144 = por %p142, %p143
      %p145 = scmp.ne.s32.totalorder %s134, %s137
      %p146 = scmp.eq.s32.totalorder %s19, 1
      %p147 = por %p145, %p146
      %p148 = scmp.ne.s32.totalorder %s137, %s138
      %p149 = scmp.eq.s32.totalorder %s19, 0
      %p150 = por %p148, %p149
      %p151 = scmp.ne.s32.totalorder %s137, %s138
      %p152 = scmp.eq.s32.totalorder %s20, 1
      %p153 = por %p151, %p152
      %p155 = scmp.ne.s32.totalorder %s138, %s154
      %p156 = scmp.eq.s32.totalorder %s20, 0
      %p157 = por %p155, %p156
      %p158 = scmp.le.s32.totalorder 1, %s14
      %p159 = scmp.lt.s32.totalorder %s14, 3
      %p160 = pnand %p158, %p159
      %p161 = pneg %p160
      // Predicated region
      $region9: #{tpu_custom_call.1} parent=5 // pred_check
        _
      $region10: #{tpu_custom_call.1} parent=5 // pred_check_branch
        %163 = sbr.rel (%p160) target = $region12
      $region11: #{tpu_custom_call.1} parent=5 // pred_region
        %s164 = ssub.s32 %s14, 1
        // Predicated region
        $region13: #{tpu_custom_call.1} parent=11 // pred_check
          %p165 = pneg %p61
        $region14: #{tpu_custom_call.1} parent=11 // pred_check_branch
          %167 = sbr.rel (%p165) target = $region16
        $region15: #{tpu_custom_call.1} parent=11 // pred_region
          _
        $region16: #{tpu_custom_call.1} parent=11 // pred_fallthru
          _
        // Predicated region
        $region17: #{tpu_custom_call.1} parent=11 // pred_check
          %p168 = pneg %p82
        $region18: #{tpu_custom_call.1} parent=11 // pred_check_branch
          %170 = sbr.rel (%p168) target = $region20
        $region19: #{tpu_custom_call.1} parent=11 // pred_region
          _
        $region20: #{tpu_custom_call.1} parent=11 // pred_fallthru
          _
        // Predicated region
        $region21: #{tpu_custom_call.1} parent=11 // pred_check
          %p171 = pneg %p103
        $region22: #{tpu_custom_call.1} parent=11 // pred_check_branch
          %173 = sbr.rel (%p171) target = $region24
        $region23: #{tpu_custom_call.1} parent=11 // pred_region
          _
        $region24: #{tpu_custom_call.1} parent=11 // pred_fallthru
          _
        // Predicated region
        $region25: #{tpu_custom_call.1} parent=11 // pred_check
          %p174 = pneg %p124
        $region26: #{tpu_custom_call.1} parent=11 // pred_check_branch
          %176 = sbr.rel (%p174) target = $region28
        $region27: #{tpu_custom_call.1} parent=11 // pred_region
          _
        $region28: #{tpu_custom_call.1} parent=11 // pred_fallthru
          _
      $region12: #{tpu_custom_call.1} parent=5 // pred_fallthru
        _
      %p177 = scmp.lt.s32.totalorder %s14, 2
      // Predicated region
      $region29: #{tpu_custom_call.1} parent=5 // pred_check
        %p178 = pneg %p177
      $region30: #{tpu_custom_call.1} parent=5 // pred_check_branch
        %180 = sbr.rel (%p178) target = $region32
      $region31: #{tpu_custom_call.1} parent=5 // pred_region
        // Predicated region
        $region33: #{tpu_custom_call.1} parent=31 // pred_check
          %p181 = pneg %p34
        $region34: #{tpu_custom_call.1} parent=31 // pred_check_branch
          %183 = sbr.rel (%p181) target = $region36
        $region35: #{tpu_custom_call.1} parent=31 // pred_region
          %p184 = scmp.lt.s32.totalorder %s14, 1
          %s185 = scalar_select %p184, %s14, 1
          %s186 = smul.addr %s185, 2
          %s187 = smul.addr %s186, 8
          %s188 = scalar_lea.vmem %s0, %s187
        $region36: #{tpu_custom_call.1} parent=31 // pred_fallthru
          _
      $region32: #{tpu_custom_call.1} parent=5 // pred_fallthru
        _
      %p189 = scmp.le.s32.totalorder 1, %s14
      %p190 = scmp.lt.s32.totalorder %s14, 3
      %p191 = pnand %p189, %p190
      %p192 = pneg %p191
      // Predicated region
      $region37: #{tpu_custom_call.1} parent=5 // pred_check
        _
      $region38: #{tpu_custom_call.1} parent=5 // pred_check_branch
        %194 = sbr.rel (%p191) target = $region40
      $region39: #{tpu_custom_call.1} parent=5 // pred_region
        %s195 = ssub.s32 %s14, 1
        %p196 = scmp.lt.s32.totalorder %s19, 1
        %s197 = scalar_select %p196, %s19, 1
        %s198 = smul.addr %s197, 2
        %s199 = smul.addr %s198, 8
        %s200 = scalar_lea.vmem %s0, %s199
        %p201 = pneg %p40
        %p202 = pneg %p37
        %p203 = pneg %p61
        %p204 = pneg %p58
        %p205 = pneg %p82
        %p206 = pneg %p79
        %p207 = pneg %p103
        %p208 = pneg %p100
        %p209 = pneg %p124
        %p210 = pneg %p121
        %p211 = pneg %p150
        %p212 = pneg %p147
        %s213 = sand.u32 %s137, 1
        %s214 = scalar_lea.sflag [#allocation3], %s213
        %s215 = sand.u32 %s137, 1
        %s216 = smul.addr %s215, 16
        %s217 = scalar_lea.vmem [#allocation2], %s216
        %p218 = scmp.lt.s32.totalorder %s19, 1
        %s219 = scalar_select %p218, %s19, 1
        %s220 = smul.addr %s219, 2
        %s221 = smul.addr %s220, 8
        %s222 = scalar_lea.vmem %s0, %s221
        %v223 = vld [vmem:[%s222] sm:$0xff]
        %v224 = vld [vmem:[%s222 + $0x8] sm:$0xff]
        %v225 = vadd.f32 %v223, %v224
        %v226 = vrot.slane %v225, 4
        %v227 = vadd.f32 %v225, %v226
        %v228 = vrot.slane %v227, 2
        %v229 = vadd.f32 %v227, %v228
        %v230 = vrot.slane %v229, 1
        %v231 = vadd.f32 %v229, %v230
        %v232 = vmul.f32 %v231, 0.00390625
        %v233 = vld [vmem:[%s1] sm:$0xff]
        %v234 = vld [vmem:[%s1 + $0x8] sm:$0xff]
        %v235 = vld [vmem:[%s1 + $0x10] sm:$0xff]
        %v236 = vld [vmem:[%s1 + $0x18] sm:$0xff]
        %v237 = vld [vmem:[%s1 + $0x20] sm:$0xff]
        %v238 = vld [vmem:[%s1 + $0x28] sm:$0xff]
        %v239 = vld [vmem:[%s1 + $0x30] sm:$0xff]
        %v240 = vld [vmem:[%s1 + $0x38] sm:$0xff]
        %v241 = vld [vmem:[%s1 + $0x40] sm:$0xff]
        %v242 = vld [vmem:[%s1 + $0x48] sm:$0xff]
        %v243 = vld [vmem:[%s1 + $0x50] sm:$0xff]
        %v244 = vld [vmem:[%s1 + $0x58] sm:$0xff]
        %v245 = vld [vmem:[%s1 + $0x60] sm:$0xff]
        %v246 = vld [vmem:[%s1 + $0x68] sm:$0xff]
        %v247 = vld [vmem:[%s1 + $0x70] sm:$0xff]
        %v248 = vld [vmem:[%s1 + $0x78] sm:$0xff]
        %v249 = vld [vmem:[%s2] sm:$0x1]
        %250 = vmatprep.subr.mxu0 0.0
        %251 = vmatpush1.msra.mxu0 %v233
        %252 = vmatprep.subr.mxu0 0.0
        %253 = vmatpush1.msra.mxu0 %v234
        %254 = vmatprep.subr.mxu0 0.0
        %255 = vmatpush1.msra.mxu0 %v235
        %256 = vmatprep.subr.mxu0 0.0
        %257 = vmatpush1.msra.mxu0 %v236
        %258 = vmatprep.subr.mxu0 0.0
        %259 = vmatpush1.msra.mxu0 %v237
        %260 = vmatprep.subr.mxu0 0.0
        %261 = vmatpush1.msra.mxu0 %v238
        %262 = vmatprep.subr.mxu0 0.0
        %263 = vmatpush1.msra.mxu0 %v239
        %264 = vmatprep.subr.mxu0 0.0
        %265 = vmatpush1.msra.mxu0 %v240
        %266 = vmatprep.subr.mxu0 0.0
        %267 = vmatpush1.msra.mxu0 %v241
        %268 = vmatprep.subr.mxu0 0.0
        %269 = vmatpush1.msra.mxu0 %v242
        %270 = vmatprep.subr.mxu0 0.0
        %271 = vmatpush1.msra.mxu0 %v243
        %272 = vmatprep.subr.mxu0 0.0
        %273 = vmatpush1.msra.mxu0 %v244
        %274 = vmatprep.subr.mxu0 0.0
        %275 = vmatpush1.msra.mxu0 %v245
        %276 = vmatprep.subr.mxu0 0.0
        %277 = vmatpush1.msra.mxu0 %v246
        %278 = vmatprep.subr.mxu0 0.0
        %279 = vmatpush1.msra.mxu0 %v247
        %280 = vmatprep.subr.mxu0 0.0
        %281 = vmatpush1.msra.mxu0 %v248
        %282 = vmatprep.subr.mxu0 0.0
        %283 = vmatpush1.msra.mxu0 0.0
        %284 = vmatprep.subr.mxu0 0.0
        %285 = vmatpush1.msra.mxu0 0.0
        %286 = vmatprep.subr.mxu0 0.0
        %287 = vmatpush1.msra.mxu0 0.0
        %288 = vmatprep.subr.mxu0 0.0
        %289 = vmatpush1.msra.mxu0 0.0
        %290 = vmatprep.subr.mxu0 0.0
        %291 = vmatpush1.msra.mxu0 0.0
        %292 = vmatprep.subr.mxu0 0.0
        %293 = vmatpush1.msra.mxu0 0.0
        %294 = vmatprep.subr.mxu0 0.0
        %295 = vmatpush1.msra.mxu0 0.0
        %296 = vmatprep.subr.mxu0 0.0
        %297 = vmatpush1.msra.mxu0 0.0
        %298 = vmatprep.subr.mxu0 0.0
        %299 = vmatpush1.msra.mxu0 0.0
        %300 = vmatprep.subr.mxu0 0.0
        %301 = vmatpush1.msra.mxu0 0.0
        %302 = vmatprep.subr.mxu0 0.0
        %303 = vmatpush1.msra.mxu0 0.0
        %304 = vmatprep.subr.mxu0 0.0
        %305 = vmatpush1.msra.mxu0 0.0
        %306 = vmatprep.subr.mxu0 0.0
        %307 = vmatpush1.msra.mxu0 0.0
        %308 = vmatprep.subr.mxu0 0.0
        %309 = vmatpush1.msra.mxu0 0.0
        %310 = vmatprep.subr.mxu0 0.0
        %311 = vmatpush1.msra.mxu0 0.0
        %312 = vmatprep.subr.mxu0 0.0
        %313 = vmatpush1.msra.mxu0 0.0
        %314 = vmatprep.mubr.f32.mxu0 0.0
        %315 = vmatmul.mubr.f32.gmra.mrb[0].mxu0 %v232
        %v316 = vpop.f32.mrb[0].mxu0
        %v317 = vadd.f32 %v249, %v316
        %v318 = vpop.f32.mrb[0].mxu0
        %319 = vdwg.mxu0
        %v320 = vmax.f32 %v317, 0.0
        %v321 = vld [vmem:[%s3] sm:$0x3]
        %v322 = vld [vmem:[%s4] sm:$0x1]
        %vm323 = vcmask 15360
        %v325 = vsel %vm323, %v320, 0
        %vm327 = vcmask 1041408
        %v329 = vsel %vm327, %v321, 0
        %331 = vmatprep.subr.mxu0 0.0
        %332 = vmatpush1.msra.mxu0 %v329
        %333 = vmatprep.subr.mxu0 0.0
        %334 = vmatpush1.msra.mxu0 0.0
        %335 = vmatprep.subr.mxu0 0.0
        %336 = vmatpush1.msra.mxu0 0.0
        %337 = vmatprep.subr.mxu0 0.0
        %338 = vmatpush1.msra.mxu0 0.0
        %339 = vmatprep.subr.mxu0 0.0
        %340 = vmatpush1.msra.mxu0 0.0
        %341 = vmatprep.subr.mxu0 0.0
        %342 = vmatpush1.msra.mxu0 0.0
        %343 = vmatprep.subr.mxu0 0.0
        %344 = vmatpush1.msra.mxu0 0.0
        %345 = vmatprep.subr.mxu0 0.0
        %346 = vmatpush1.msra.mxu0 0.0
        %347 = vmatprep.subr.mxu0 0.0
        %348 = vmatpush1.msra.mxu0 0.0
        %349 = vmatprep.subr.mxu0 0.0
        %350 = vmatpush1.msra.mxu0 0.0
        %351 = vmatprep.subr.mxu0 0.0
        %352 = vmatpush1.msra.mxu0 0.0
        %353 = vmatprep.subr.mxu0 0.0
        %354 = vmatpush1.msra.mxu0 0.0
        %355 = vmatprep.subr.mxu0 0.0
        %356 = vmatpush1.msra.mxu0 0.0
        %357 = vmatprep.subr.mxu0 0.0
        %358 = vmatpush1.msra.mxu0 0.0
        %359 = vmatprep.subr.mxu0 0.0
        %360 = vmatpush1.msra.mxu0 0.0
        %361 = vmatprep.subr.mxu0 0.0
        %362 = vmatpush1.msra.mxu0 0.0
        %363 = vmatprep.subr.mxu0 0.0
        %364 = vmatpush1.msra.mxu0 0.0
        %365 = vmatprep.subr.mxu0 0.0
        %366 = vmatpush1.msra.mxu0 0.0
        %367 = vmatprep.subr.mxu0 0.0
        %368 = vmatpush1.msra.mxu0 0.0
        %369 = vmatprep.subr.mxu0 0.0
        %370 = vmatpush1.msra.mxu0 0.0
        %371 = vmatprep.subr.mxu0 0.0
        %372 = vmatpush1.msra.mxu0 0.0
        %373 = vmatprep.subr.mxu0 0.0
        %374 = vmatpush1.msra.mxu0 0.0
        %375 = vmatprep.subr.mxu0 0.0
        %376 = vmatpush1.msra.mxu0 0.0
        %377 = vmatprep.subr.mxu0 0.0
        %378 = vmatpush1.msra.mxu0 0.0
        %379 = vmatprep.subr.mxu0 0.0
        %380 = vmatpush1.msra.mxu0 0.0
        %381 = vmatprep.subr.mxu0 0.0
        %382 = vmatpush1.msra.mxu0 0.0
        %383 = vmatprep.subr.mxu0 0.0
        %384 = vmatpush1.msra.mxu0 0.0
        %385 = vmatprep.subr.mxu0 0.0
        %386 = vmatpush1.msra.mxu0 0.0
        %387 = vmatprep.subr.mxu0 0.0
        %388 = vmatpush1.msra.mxu0 0.0
        %389 = vmatprep.subr.mxu0 0.0
        %390 = vmatpush1.msra.mxu0 0.0
        %391 = vmatprep.subr.mxu0 0.0
        %392 = vmatpush1.msra.mxu0 0.0
        %393 = vmatprep.subr.mxu0 0.0
        %394 = vmatpush1.msra.mxu0 0.0
        %395 = vmatprep.mubr.f32.mxu0 0.0
        %396 = vmatmul.mubr.f32.gmra.mrb[0].mxu0 %v325
        %v397 = vpop.f32.mrb[0].mxu0
        %v398 = vadd.f32 %v322, %v397
        %v399 = vpop.f32.mrb[0].mxu0
        %400 = vdwg.mxu0
        %v401 = vxor.u32 %v398, 2147483648
        %v402 = vmul.f32 %v401, 1.442695
        %v403 = vpow.pop %v402
        %v404 = vadd.f32 %v403, 1.0
        %v405 = vrcp.pop %v404
        %v406 = vmul.f32 1.0, %v405
        %v407 = vlaneseq
        %v408 = vshrl.u32 %v407, 7
        %v409 = vsub.s32 0, %v408
        %v410 = vrot.slane %v406, %v409
        %v411 = vmul.f32 %v223, %v410
        %v412 = vmul.f32 %v224, %v410
        %413 = vst [vmem:[%s217] sm:$0xff] %v411
        %414 = vst [vmem:[%s217 + $0x8] sm:$0xff] %v412
        %s415 = sand.u32 %s137, 1
        %s416 = scalar_lea.sflag [#allocation3], %s415
        %s417 = sand.u32 %s137, 1
        %s418 = smul.addr %s417, 16
        %s419 = scalar_lea.vmem [#allocation2], %s418
        // Predicated region
        $region41: #{tpu_custom_call.1} parent=39 // pred_check
          %p420 = pneg %p147
        $region42: #{tpu_custom_call.1} parent=39 // pred_check_branch
          %422 = sbr.rel (%p420) target = $region44
        $region43: #{tpu_custom_call.1} parent=39 // pred_region
          %s424 = ssub.s32 256, 256
          %425 = vsyncadd %s416, %s424
          %s426 = smul.addr %s19, 2
          %s427 = smul.addr %s426, 128
          %s428 = scalar_lea.hbm %s5, %s427
          %s429 = sshll.u32 %s419, 4
          %s430 = int_to_ptr.vmem [resolvable:$true] %s429
          %435 = dma.vmem_to_hbm [thread:$0]  %s430, 256, %s428, %s416, 128, 128, 8
        $region44: #{tpu_custom_call.1} parent=39 // pred_fallthru
          _
      $region40: #{tpu_custom_call.1} parent=5 // pred_fallthru
        _
      %p436 = scmp.le.s32.totalorder 2, %s14
      // Predicated region
      $region45: #{tpu_custom_call.1} parent=5 // pred_check
        %p437 = pneg %p436
      $region46: #{tpu_custom_call.1} parent=5 // pred_check_branch
        %439 = sbr.rel (%p437) target = $region48
      $region47: #{tpu_custom_call.1} parent=5 // pred_region
        %s440 = ssub.s32 %s14, 2
        // Predicated region
        $region49: #{tpu_custom_call.1} parent=47 // pred_check
          %p441 = pneg %p153
        $region50: #{tpu_custom_call.1} parent=47 // pred_check_branch
          %443 = sbr.rel (%p441) target = $region52
        $region51: #{tpu_custom_call.1} parent=47 // pred_region
          %s444 = sand.u32 %s138, 1
          %s445 = scalar_lea.sflag [#allocation3], %s444
          %s446 = sand.u32 %s138, 1
          %s447 = smul.addr %s446, 16
          %s448 = scalar_lea.vmem [#allocation2], %s447
          %449 = dma.done %s445, 256
        $region52: #{tpu_custom_call.1} parent=47 // pred_fallthru
          _
      $region48: #{tpu_custom_call.1} parent=5 // pred_fallthru
        _
    $region6: #{tpu_custom_call.1} parent=1 // loop_footer
      %s18 = sadd.s32 1, %s14
    $region7: #{tpu_custom_call.1} parent=1 // loop_footer_branch
      %13 = sbr.rel target = $region3
    $region8: #{tpu_custom_call.1} parent=1 // loop_exit
      _
    %450 = vsyncpa [#allocation3], 1
    %s451 = scalar_lea.sflag [#allocation3], 1
    %452 = vsyncpa %s451, 1

// kernel: tpu_custom_call.1
$region0: #{tpu_custom_call.1}
  #allocation0 [shape = 'u32[]', space=smem, size = 0x4, offset = 0x4, fixed_abs, tag = 'smem constant byte address 0x4 - core index']
  #allocation1 [shape = 'u32[144,128]{1,0:T(1,128)}', space=vmem, size = 0x12000, scoped, tag = 'internal scratch']
  %s0 = inlined_call_operand.vmem [shape: f32[2,16,128], index: 0, kind: input, shape index: {}]
  %s1 = inlined_call_operand.vmem [shape: f32[128,2], index: 1, kind: input, shape index: {}]
  %s2 = inlined_call_operand.vmem [shape: f32[1,2], index: 2, kind: input, shape index: {}]
  %s3 = inlined_call_operand.vmem [shape: f32[2,128], index: 3, kind: input, shape index: {}]
  %s4 = inlined_call_operand.vmem [shape: f32[1,128], index: 4, kind: input, shape index: {}]
  %s5 = inlined_call_operand.hbm [shape: f32[2,16,128], index: 5, kind: output, shape index: {}]
  %s6 = sld [smem:[#allocation0]]
  $region53: #{tpu_custom_call.1} parent=0
    _
  %s8 = ssub.s32 1, %s6
  %s9 = scalar_select 0, %s8, %s6
  $region1: #{tpu_custom_call.1} parent=0
    #allocation2 [shape = 'u8[16384]{0}', space=vmem, size = 0x4000, scoped, tag = 'output window, operand 0']
    #allocation3 [shape = 's32[2]{0}', space=sflag, size = 0x8, scoped, tag = 'scoped memory for tpu_custom_call.1']
    %10 = vsyncpa [#allocation3], 0
    %s11 = scalar_lea.sflag [#allocation3], 1
    %12 = vsyncpa %s11, 0
    loop: start=0, step=1, limit=4
    $region2: #{tpu_custom_call.1} parent=1 // loop_pre_header
      _
    $region3: #{tpu_custom_call.1} parent=1 // loop_header
      %s14 = sphi 0, %s18
      %p15 = scmp.ge.s32.totalorder %s14, 4
      %s24 = sphi 0, %s26
      %s27 = sphi 0, %s24
      %s28 = sphi 0, %s27
      %s44 = sphi 0, %s28
      %s48 = sphi 0, %s48
      %s50 = sphi 0, %s48
      %s51 = sphi 0, %s50
      %s65 = sphi 0, %s51
      %s69 = sphi 0, %s69
      %s71 = sphi 0, %s69
      %s72 = sphi 0, %s71
      %s86 = sphi 0, %s72
      %s90 = sphi 0, %s90
      %s92 = sphi 0, %s90
      %s93 = sphi 0, %s92
      %s107 = sphi 0, %s93
      %s111 = sphi 0, %s111
      %s113 = sphi 0, %s111
      %s114 = sphi 0, %s113
      %s128 = sphi 0, %s114
      %s134 = sphi 0, %s136
      %s137 = sphi 0, %s134
      %s138 = sphi 0, %s137
      %s154 = sphi 0, %s138
    $region4: #{tpu_custom_call.1} parent=1 // loop_header_branch
      %17 = sbr.rel (%p15) target = $region8
    $region5: #{tpu_custom_call.1} parent=1 // loop_body
      %s19 = ssub.s32 %s14, 1
      %s20 = ssub.s32 %s14, 2
      %s21 = sadd.s32 %s14, 1
      %s22 = ssub.s32 %s14, %s21
      %p23 = scmp.eq.s32.totalorder %s22, 0
      %s25 = sadd.s32 %s24, 1
      %s26 = scalar_select %p23, %s24, %s25
      %p29 = pneg %p23
      %p30 = scmp.eq.s32.totalorder %s14, 1
      %p31 = por %p29, %p30
      %p32 = scmp.ne.s32.totalorder %s24, %s27
      %p33 = scmp.eq.s32.totalorder %s14, 0
      %p34 = por %p32, %p33
      %p35 = scmp.ne.s32.totalorder %s24, %s27
      %p36 = scmp.eq.s32.totalorder %s19, 1
      %p37 = por %p35, %p36
      %p38 = scmp.ne.s32.totalorder %s27, %s28
      %p39 = scmp.eq.s32.totalorder %s19, 0
      %p40 = por %p38, %p39
      %p41 = scmp.ne.s32.totalorder %s27, %s28
      %p42 = scmp.eq.s32.totalorder %s20, 1
      %p43 = por %p41, %p42
      %p45 = scmp.ne.s32.totalorder %s28, %s44
      %p46 = scmp.eq.s32.totalorder %s20, 0
      %p47 = por %p45, %p46
      %s49 = sadd.s32 %s48, 1
      %p52 = scmp.eq.s32.totalorder %s14, 1
      %p53 = scmp.ne.s32.totalorder %s48, %s50
      %p54 = scmp.eq.s32.totalorder %s14, 0
      %p55 = por %p53, %p54
      %p56 = scmp.ne.s32.totalorder %s48, %s50
      %p57 = scmp.eq.s32.totalorder %s19, 1
      %p58 = por %p56, %p57
      %p59 = scmp.ne.s32.totalorder %s50, %s51
      %p60 = scmp.eq.s32.totalorder %s19, 0
      %p61 = por %p59, %p60
      %p62 = scmp.ne.s32.totalorder %s50, %s51
      %p63 = scmp.eq.s32.totalorder %s20, 1
      %p64 = por %p62, %p63
      %p66 = scmp.ne.s32.totalorder %s51, %s65
      %p67 = scmp.eq.s32.totalorder %s20, 0
      %p68 = por %p66, %p67
      %s70 = sadd.s32 %s69, 1
      %p73 = scmp.eq.s32.totalorder %s14, 1
      %p74 = scmp.ne.s32.totalorder %s69, %s71
      %p75 = scmp.eq.s32.totalorder %s14, 0
      %p76 = por %p74, %p75
      %p77 = scmp.ne.s32.totalorder %s69, %s71
      %p78 = scmp.eq.s32.totalorder %s19, 1
      %p79 = por %p77, %p78
      %p80 = scmp.ne.s32.totalorder %s71, %s72
      %p81 = scmp.eq.s32.totalorder %s19, 0
      %p82 = por %p80, %p81
      %p83 = scmp.ne.s32.totalorder %s71, %s72
      %p84 = scmp.eq.s32.totalorder %s20, 1
      %p85 = por %p83, %p84
      %p87 = scmp.ne.s32.totalorder %s72, %s86
      %p88 = scmp.eq.s32.totalorder %s20, 0
      %p89 = por %p87, %p88
      %s91 = sadd.s32 %s90, 1
      %p94 = scmp.eq.s32.totalorder %s14, 1
      %p95 = scmp.ne.s32.totalorder %s90, %s92
      %p96 = scmp.eq.s32.totalorder %s14, 0
      %p97 = por %p95, %p96
      %p98 = scmp.ne.s32.totalorder %s90, %s92
      %p99 = scmp.eq.s32.totalorder %s19, 1
      %p100 = por %p98, %p99
      %p101 = scmp.ne.s32.totalorder %s92, %s93
      %p102 = scmp.eq.s32.totalorder %s19, 0
      %p103 = por %p101, %p102
      %p104 = scmp.ne.s32.totalorder %s92, %s93
      %p105 = scmp.eq.s32.totalorder %s20, 1
      %p106 = por %p104, %p105
      %p108 = scmp.ne.s32.totalorder %s93, %s107
      %p109 = scmp.eq.s32.totalorder %s20, 0
      %p110 = por %p108, %p109
      %s112 = sadd.s32 %s111, 1
      %p115 = scmp.eq.s32.totalorder %s14, 1
      %p116 = scmp.ne.s32.totalorder %s111, %s113
      %p117 = scmp.eq.s32.totalorder %s14, 0
      %p118 = por %p116, %p117
      %p119 = scmp.ne.s32.totalorder %s111, %s113
      %p120 = scmp.eq.s32.totalorder %s19, 1
      %p121 = por %p119, %p120
      %p122 = scmp.ne.s32.totalorder %s113, %s114
      %p123 = scmp.eq.s32.totalorder %s19, 0
      %p124 = por %p122, %p123
      %p125 = scmp.ne.s32.totalorder %s113, %s114
      %p126 = scmp.eq.s32.totalorder %s20, 1
      %p127 = por %p125, %p126
      %p129 = scmp.ne.s32.totalorder %s114, %s128
      %p130 = scmp.eq.s32.totalorder %s20, 0
      %p131 = por %p129, %p130
      %s132 = ssub.s32 %s14, %s21
      %p133 = scmp.eq.s32.totalorder %s132, 0
      %s135 = sadd.s32 %s134, 1
      %s136 = scalar_select %p133, %s134, %s135
      %p139 = pneg %p133
      %p140 = scmp.eq.s32.totalorder %s14, 1
      %p141 = por %p139, %p140
      %p142 = scmp.ne.s32.totalorder %s134, %s137
      %p143 = scmp.eq.s32.totalorder %s14, 0
      %p144 = por %p142, %p143
      %p145 = scmp.ne.s32.totalorder %s134, %s137
      %p146 = scmp.eq.s32.totalorder %s19, 1
      %p147 = por %p145, %p146
      %p148 = scmp.ne.s32.totalorder %s137, %s138
      %p149 = scmp.eq.s32.totalorder %s19, 0
      %p150 = por %p148, %p149
      %p151 = scmp.ne.s32.totalorder %s137, %s138
      %p152 = scmp.eq.s32.totalorder %s20, 1
      %p153 = por %p151, %p152
      %p155 = scmp.ne.s32.totalorder %s138, %s154
      %p156 = scmp.eq.s32.totalorder %s20, 0
      %p157 = por %p155, %p156
      %p158 = scmp.le.s32.totalorder 1, %s14
      %p159 = scmp.lt.s32.totalorder %s14, 3
      %p160 = pnand %p158, %p159
      %p161 = pneg %p160
      // Predicated region
      $region9: #{tpu_custom_call.1} parent=5 // pred_check
        _
      $region10: #{tpu_custom_call.1} parent=5 // pred_check_branch
        %163 = sbr.rel (%p160) target = $region12
      $region11: #{tpu_custom_call.1} parent=5 // pred_region
        %s164 = ssub.s32 %s14, 1
        // Predicated region
        $region13: #{tpu_custom_call.1} parent=11 // pred_check
          %p165 = pneg %p61
        $region14: #{tpu_custom_call.1} parent=11 // pred_check_branch
          %167 = sbr.rel (%p165) target = $region16
        $region15: #{tpu_custom_call.1} parent=11 // pred_region
          _
        $region16: #{tpu_custom_call.1} parent=11 // pred_fallthru
          _
        // Predicated region
        $region17: #{tpu_custom_call.1} parent=11 // pred_check
          %p168 = pneg %p82
        $region18: #{tpu_custom_call.1} parent=11 // pred_check_branch
          %170 = sbr.rel (%p168) target = $region20
        $region19: #{tpu_custom_call.1} parent=11 // pred_region
          _
        $region20: #{tpu_custom_call.1} parent=11 // pred_fallthru
          _
        // Predicated region
        $region21: #{tpu_custom_call.1} parent=11 // pred_check
          %p171 = pneg %p103
        $region22: #{tpu_custom_call.1} parent=11 // pred_check_branch
          %173 = sbr.rel (%p171) target = $region24
        $region23: #{tpu_custom_call.1} parent=11 // pred_region
          _
        $region24: #{tpu_custom_call.1} parent=11 // pred_fallthru
          _
        // Predicated region
        $region25: #{tpu_custom_call.1} parent=11 // pred_check
          %p174 = pneg %p124
        $region26: #{tpu_custom_call.1} parent=11 // pred_check_branch
          %176 = sbr.rel (%p174) target = $region28
        $region27: #{tpu_custom_call.1} parent=11 // pred_region
          _
        $region28: #{tpu_custom_call.1} parent=11 // pred_fallthru
          _
      $region12: #{tpu_custom_call.1} parent=5 // pred_fallthru
        _
      %p177 = scmp.lt.s32.totalorder %s14, 2
      // Predicated region
      $region29: #{tpu_custom_call.1} parent=5 // pred_check
        %p178 = pneg %p177
      $region30: #{tpu_custom_call.1} parent=5 // pred_check_branch
        %180 = sbr.rel (%p178) target = $region32
      $region31: #{tpu_custom_call.1} parent=5 // pred_region
        // Predicated region
        $region33: #{tpu_custom_call.1} parent=31 // pred_check
          %p181 = pneg %p34
        $region34: #{tpu_custom_call.1} parent=31 // pred_check_branch
          %183 = sbr.rel (%p181) target = $region36
        $region35: #{tpu_custom_call.1} parent=31 // pred_region
          %p184 = scmp.lt.s32.totalorder %s14, 1
          %s185 = scalar_select %p184, %s14, 1
          %s186 = smul.addr %s185, 2
          %s187 = smul.addr %s186, 8
          %s188 = scalar_lea.vmem %s0, %s187
        $region36: #{tpu_custom_call.1} parent=31 // pred_fallthru
          _
      $region32: #{tpu_custom_call.1} parent=5 // pred_fallthru
        _
      %p189 = scmp.le.s32.totalorder 1, %s14
      %p190 = scmp.lt.s32.totalorder %s14, 3
      %p191 = pnand %p189, %p190
      %p192 = pneg %p191
      // Predicated region
      $region37: #{tpu_custom_call.1} parent=5 // pred_check
        _
      $region38: #{tpu_custom_call.1} parent=5 // pred_check_branch
        %194 = sbr.rel (%p191) target = $region40
      $region39: #{tpu_custom_call.1} parent=5 // pred_region
        %s195 = ssub.s32 %s14, 1
        %p196 = scmp.lt.s32.totalorder %s19, 1
        %s197 = scalar_select %p196, %s19, 1
        %s198 = smul.addr %s197, 2
        %s199 = smul.addr %s198, 8
        %s200 = scalar_lea.vmem %s0, %s199
        %p201 = pneg %p40
        %p202 = pneg %p37
        %p203 = pneg %p61
        %p204 = pneg %p58
        %p205 = pneg %p82
        %p206 = pneg %p79
        %p207 = pneg %p103
        %p208 = pneg %p100
        %p209 = pneg %p124
        %p210 = pneg %p121
        %p211 = pneg %p150
        %p212 = pneg %p147
        %s213 = sand.u32 %s137, 1
        %s214 = scalar_lea.sflag [#allocation3], %s213
        %s215 = sand.u32 %s137, 1
        %s216 = smul.addr %s215, 16
        %s217 = scalar_lea.vmem [#allocation2], %s216
        %p218 = scmp.lt.s32.totalorder %s19, 1
        %s219 = scalar_select %p218, %s19, 1
        %s220 = smul.addr %s219, 2
        %s221 = smul.addr %s220, 8
        %s222 = scalar_lea.vmem %s0, %s221
        %v223 = vld [vmem:[%s222] sm:$0xff]
        %v224 = vld [vmem:[%s222 + $0x8] sm:$0xff]
        %v225 = vadd.f32 %v223, %v224
        %v226 = vrot.slane %v225, 4
        %v227 = vadd.f32 %v225, %v226
        %v228 = vrot.slane %v227, 2
        %v229 = vadd.f32 %v227, %v228
        %v230 = vrot.slane %v229, 1
        %v231 = vadd.f32 %v229, %v230
        %v232 = vmul.f32 %v231, 0.00390625
        %v233 = vld [vmem:[%s1] sm:$0xff]
        %v234 = vld [vmem:[%s1 + $0x8] sm:$0xff]
        %v235 = vld [vmem:[%s1 + $0x10] sm:$0xff]
        %v236 = vld [vmem:[%s1 + $0x18] sm:$0xff]
        %v237 = vld [vmem:[%s1 + $0x20] sm:$0xff]
        %v238 = vld [vmem:[%s1 + $0x28] sm:$0xff]
        %v239 = vld [vmem:[%s1 + $0x30] sm:$0xff]
        %v240 = vld [vmem:[%s1 + $0x38] sm:$0xff]
        %v241 = vld [vmem:[%s1 + $0x40] sm:$0xff]
        %v242 = vld [vmem:[%s1 + $0x48] sm:$0xff]
        %v243 = vld [vmem:[%s1 + $0x50] sm:$0xff]
        %v244 = vld [vmem:[%s1 + $0x58] sm:$0xff]
        %v245 = vld [vmem:[%s1 + $0x60] sm:$0xff]
        %v246 = vld [vmem:[%s1 + $0x68] sm:$0xff]
        %v247 = vld [vmem:[%s1 + $0x70] sm:$0xff]
        %v248 = vld [vmem:[%s1 + $0x78] sm:$0xff]
        %v249 = vld [vmem:[%s2] sm:$0x1]
        %250 = vmatprep.subr.mxu0 0.0
        %251 = vmatpush1.msra.mxu0 %v233
        %252 = vmatprep.subr.mxu0 0.0
        %253 = vmatpush1.msra.mxu0 %v234
        %254 = vmatprep.subr.mxu0 0.0
        %255 = vmatpush1.msra.mxu0 %v235
        %256 = vmatprep.subr.mxu0 0.0
        %257 = vmatpush1.msra.mxu0 %v236
        %258 = vmatprep.subr.mxu0 0.0
        %259 = vmatpush1.msra.mxu0 %v237
        %260 = vmatprep.subr.mxu0 0.0
        %261 = vmatpush1.msra.mxu0 %v238
        %262 = vmatprep.subr.mxu0 0.0
        %263 = vmatpush1.msra.mxu0 %v239
        %264 = vmatprep.subr.mxu0 0.0
        %265 = vmatpush1.msra.mxu0 %v240
        %266 = vmatprep.subr.mxu0 0.0
        %267 = vmatpush1.msra.mxu0 %v241
        %268 = vmatprep.subr.mxu0 0.0
        %269 = vmatpush1.msra.mxu0 %v242
        %270 = vmatprep.subr.mxu0 0.0
        %271 = vmatpush1.msra.mxu0 %v243
        %272 = vmatprep.subr.mxu0 0.0
        %273 = vmatpush1.msra.mxu0 %v244
        %274 = vmatprep.subr.mxu0 0.0
        %275 = vmatpush1.msra.mxu0 %v245
        %276 = vmatprep.subr.mxu0 0.0
        %277 = vmatpush1.msra.mxu0 %v246
        %278 = vmatprep.subr.mxu0 0.0
        %279 = vmatpush1.msra.mxu0 %v247
        %280 = vmatprep.subr.mxu0 0.0
        %281 = vmatpush1.msra.mxu0 %v248
        %282 = vmatprep.subr.mxu0 0.0
        %283 = vmatpush1.msra.mxu0 0.0
        %284 = vmatprep.subr.mxu0 0.0
        %285 = vmatpush1.msra.mxu0 0.0
        %286 = vmatprep.subr.mxu0 0.0
        %287 = vmatpush1.msra.mxu0 0.0
        %288 = vmatprep.subr.mxu0 0.0
        %289 = vmatpush1.msra.mxu0 0.0
        %290 = vmatprep.subr.mxu0 0.0
        %291 = vmatpush1.msra.mxu0 0.0
        %292 = vmatprep.subr.mxu0 0.0
        %293 = vmatpush1.msra.mxu0 0.0
        %294 = vmatprep.subr.mxu0 0.0
        %295 = vmatpush1.msra.mxu0 0.0
        %296 = vmatprep.subr.mxu0 0.0
        %297 = vmatpush1.msra.mxu0 0.0
        %298 = vmatprep.subr.mxu0 0.0
        %299 = vmatpush1.msra.mxu0 0.0
        %300 = vmatprep.subr.mxu0 0.0
        %301 = vmatpush1.msra.mxu0 0.0
        %302 = vmatprep.subr.mxu0 0.0
        %303 = vmatpush1.msra.mxu0 0.0
        %304 = vmatprep.subr.mxu0 0.0
        %305 = vmatpush1.msra.mxu0 0.0
        %306 = vmatprep.subr.mxu0 0.0
        %307 = vmatpush1.msra.mxu0 0.0
        %308 = vmatprep.subr.mxu0 0.0
        %309 = vmatpush1.msra.mxu0 0.0
        %310 = vmatprep.subr.mxu0 0.0
        %311 = vmatpush1.msra.mxu0 0.0
        %312 = vmatprep.subr.mxu0 0.0
        %313 = vmatpush1.msra.mxu0 0.0
        %314 = vmatprep.mubr.f32.mxu0 0.0
        %315 = vmatmul.mubr.f32.gmra.mrb[0].mxu0 %v232
        %v316 = vpop.f32.mrb[0].mxu0
        %v317 = vadd.f32 %v249, %v316
        %v318 = vpop.f32.mrb[0].mxu0
        %319 = vdwg.mxu0
        %v320 = vmax.f32 %v317, 0.0
        %v321 = vld [vmem:[%s3] sm:$0x3]
        %v322 = vld [vmem:[%s4] sm:$0x1]
        %vm323 = vcmask 15360
        %v325 = vsel %vm323, %v320, 0
        %vm327 = vcmask 1041408
        %v329 = vsel %vm327, %v321, 0
        %331 = vmatprep.subr.mxu0 0.0
        %332 = vmatpush1.msra.mxu0 %v329
        %333 = vmatprep.subr.mxu0 0.0
        %334 = vmatpush1.msra.mxu0 0.0
        %335 = vmatprep.subr.mxu0 0.0
        %336 = vmatpush1.msra.mxu0 0.0
        %337 = vmatprep.subr.mxu0 0.0
        %338 = vmatpush1.msra.mxu0 0.0
        %339 = vmatprep.subr.mxu0 0.0
        %340 = vmatpush1.msra.mxu0 0.0
        %341 = vmatprep.subr.mxu0 0.0
        %342 = vmatpush1.msra.mxu0 0.0
        %343 = vmatprep.subr.mxu0 0.0
        %344 = vmatpush1.msra.mxu0 0.0
        %345 = vmatprep.subr.mxu0 0.0
        %346 = vmatpush1.msra.mxu0 0.0
        %347 = vmatprep.subr.mxu0 0.0
        %348 = vmatpush1.msra.mxu0 0.0
        %349 = vmatprep.subr.mxu0 0.0
        %350 = vmatpush1.msra.mxu0 0.0
        %351 = vmatprep.subr.mxu0 0.0
        %352 = vmatpush1.msra.mxu0 0.0
        %353 = vmatprep.subr.mxu0 0.0
        %354 = vmatpush1.msra.mxu0 0.0
        %355 = vmatprep.subr.mxu0 0.0
        %356 = vmatpush1.msra.mxu0 0.0
        %357 = vmatprep.subr.mxu0 0.0
        %358 = vmatpush1.msra.mxu0 0.0
        %359 = vmatprep.subr.mxu0 0.0
        %360 = vmatpush1.msra.mxu0 0.0
        %361 = vmatprep.subr.mxu0 0.0
        %362 = vmatpush1.msra.mxu0 0.0
        %363 = vmatprep.subr.mxu0 0.0
        %364 = vmatpush1.msra.mxu0 0.0
        %365 = vmatprep.subr.mxu0 0.0
        %366 = vmatpush1.msra.mxu0 0.0
        %367 = vmatprep.subr.mxu0 0.0
        %368 = vmatpush1.msra.mxu0 0.0
        %369 = vmatprep.subr.mxu0 0.0
        %370 = vmatpush1.msra.mxu0 0.0
        %371 = vmatprep.subr.mxu0 0.0
        %372 = vmatpush1.msra.mxu0 0.0
        %373 = vmatprep.subr.mxu0 0.0
        %374 = vmatpush1.msra.mxu0 0.0
        %375 = vmatprep.subr.mxu0 0.0
        %376 = vmatpush1.msra.mxu0 0.0
        %377 = vmatprep.subr.mxu0 0.0
        %378 = vmatpush1.msra.mxu0 0.0
        %379 = vmatprep.subr.mxu0 0.0
        %380 = vmatpush1.msra.mxu0 0.0
        %381 = vmatprep.subr.mxu0 0.0
        %382 = vmatpush1.msra.mxu0 0.0
        %383 = vmatprep.subr.mxu0 0.0
        %384 = vmatpush1.msra.mxu0 0.0
        %385 = vmatprep.subr.mxu0 0.0
        %386 = vmatpush1.msra.mxu0 0.0
        %387 = vmatprep.subr.mxu0 0.0
        %388 = vmatpush1.msra.mxu0 0.0
        %389 = vmatprep.subr.mxu0 0.0
        %390 = vmatpush1.msra.mxu0 0.0
        %391 = vmatprep.subr.mxu0 0.0
        %392 = vmatpush1.msra.mxu0 0.0
        %393 = vmatprep.subr.mxu0 0.0
        %394 = vmatpush1.msra.mxu0 0.0
        %395 = vmatprep.mubr.f32.mxu0 0.0
        %396 = vmatmul.mubr.f32.gmra.mrb[0].mxu0 %v325
        %v397 = vpop.f32.mrb[0].mxu0
        %v398 = vadd.f32 %v322, %v397
        %v399 = vpop.f32.mrb[0].mxu0
        %400 = vdwg.mxu0
        %v401 = vxor.u32 %v398, 2147483648
        %v402 = vmul.f32 %v401, 1.442695
        %v403 = vpow.pop %v402
        %v404 = vadd.f32 %v403, 1.0
        %v405 = vrcp.pop %v404
        %v406 = vmul.f32 1.0, %v405
        %v407 = vlaneseq
        %v408 = vshrl.u32 %v407, 7
        %v409 = vsub.s32 0, %v408
        %v410 = vrot.slane %v406, %v409
        %v411 = vmul.f32 %v223, %v410
        %v412 = vmul.f32 %v224, %v410
        %413 = vst [vmem:[%s217] sm:$0xff] %v411
        %414 = vst [vmem:[%s217 + $0x8] sm:$0xff] %v412
        %s415 = sand.u32 %s137, 1
        %s416 = scalar_lea.sflag [#allocation3], %s415
        %s417 = sand.u32 %s137, 1
        %s418 = smul.addr %s417, 16
        %s419 = scalar_lea.vmem [#allocation2], %s418
        // Predicated region
        $region41: #{tpu_custom_call.1} parent=39 // pred_check
          %p420 = pneg %p147
        $region42: #{tpu_custom_call.1} parent=39 // pred_check_branch
          %422 = sbr.rel (%p420) target = $region44
        $region43: #{tpu_custom_call.1} parent=39 // pred_region
          %s424 = ssub.s32 256, 256
          %425 = vsyncadd %s416, %s424
          %s426 = smul.addr %s19, 2
          %s427 = smul.addr %s426, 128
          %s428 = scalar_lea.hbm %s5, %s427
          %s429 = sshll.u32 %s419, 4
          %s430 = int_to_ptr.vmem [resolvable:$true] %s429
          %435 = dma.vmem_to_hbm [thread:$0]  %s430, 256, %s428, %s416, 128, 128, 8
        $region44: #{tpu_custom_call.1} parent=39 // pred_fallthru
          _
      $region40: #{tpu_custom_call.1} parent=5 // pred_fallthru
        _
      %p436 = scmp.le.s32.totalorder 2, %s14
      // Predicated region
      $region45: #{tpu_custom_call.1} parent=5 // pred_check
        %p437 = pneg %p436
      $region46: #{tpu_custom_call.1} parent=5 // pred_check_branch
        %439 = sbr.rel (%p437) target = $region48
      $region47: #{tpu_custom_call.1} parent=5 // pred_region
        %s440 = ssub.s32 %s14, 2
        // Predicated region
        $region49: #{tpu_custom_call.1} parent=47 // pred_check
          %p441 = pneg %p153
        $region50: #{tpu_custom_call.1} parent=47 // pred_check_branch
          %443 = sbr.rel (%p441) target = $region52
        $region51: #{tpu_custom_call.1} parent=47 // pred_region
          %s444 = sand.u32 %s138, 1
          %s445 = scalar_lea.sflag [#allocation3], %s444
          %s446 = sand.u32 %s138, 1
          %s447 = smul.addr %s446, 16
          %s448 = scalar_lea.vmem [#allocation2], %s447
          %449 = dma.done %s445, 256
        $region52: #{tpu_custom_call.1} parent=47 // pred_fallthru
          _
      $region48: #{tpu_custom_call.1} parent=5 // pred_fallthru
        _
    $region6: #{tpu_custom_call.1} parent=1 // loop_footer
      %s18 = sadd.s32 1, %s14
    $region7: #{tpu_custom_call.1} parent=1 // loop_footer_branch
      %13 = sbr.rel target = $region3
    $region8: #{tpu_custom_call.1} parent=1 // loop_exit
      _
    %450 = vsyncpa [#allocation3], 1
    %s451 = scalar_lea.sflag [#allocation3], 1
    %452 = vsyncpa %s451, 1

</llo_original>
